<compile_context>
chip_gen: v7x
topology: tpu7x:2x2x1
jax: 0.10.0
libtpu: 0.0.40
codegen_flags: <defaults>
</compile_context>

<pallas_src>
import functools
import math

import jax
import jax.numpy as jnp
from jax import lax
from jax.experimental import pallas as pl
from jax.experimental.pallas import tpu as pltpu


def _round_up(v, m):
    return ((v + m - 1) // m) * m


def _sublane_multiple(dtype):
    """Minimum second-to-last tile dim for a dtype (f32: 8, bf16: 16, int8: 32)."""
    itemsize = jnp.dtype(dtype).itemsize
    if itemsize >= 4:
        return 8
    if itemsize == 2:
        return 16
    return 32


def _pick_tile(size, candidates):
    """Pick the candidate minimizing padding; ties broken toward larger tiles."""
    best_c, best_pad = None, None
    for c in sorted(candidates, reverse=True):
        pad = _round_up(size, c) - size
        if best_pad is None or pad < best_pad:
            best_c, best_pad = c, pad
    return best_c


def _vmem_budget():
    """Generation-aware VMEM budget (v7x: 64 MiB/TC, v5e/v6e: 128 MiB)."""
    cap = None
    try:
        cap = getattr(pltpu.get_tpu_info(), "vmem_capacity_bytes", None)
    except Exception:
        cap = None
    if not cap:
        cap = 64 * 1024 * 1024          # conservative fallback: assume v7x
    return min(int(cap * 3 // 4), 96 * 1024 * 1024)


def _make_kernel(norm, use_bias, acc_in_out):
    """Build the kernel for a given static configuration.

    Ref layout: x, w_t, [bias], out, [acc scratch if not acc_in_out],
                [sum(x*x) scratch if norm].
    """

    def kernel(*refs):
        idx = 0
        x_ref = refs[idx]; idx += 1
        w_ref = refs[idx]; idx += 1
        b_ref = None
        if use_bias:
            b_ref = refs[idx]; idx += 1
        o_ref = refs[idx]; idx += 1
        if acc_in_out:
            acc_ref = o_ref                 # f32 output block resident across k
        else:
            acc_ref = refs[idx]; idx += 1   # f32 VMEM scratch accumulator
        ss_ref = refs[idx] if norm else None

        j = pl.program_id(1)
        k = pl.program_id(2)

        @pl.when(k == 0)
        def _init():
            acc_ref[...] = jnp.zeros_like(acc_ref)

        x = x_ref[...]                      # [tm, tk]  (native dtype -> MXU)
        w = w_ref[...]                      # [tk, tn]  (pre-transposed W^T)
        # Plain [M,K]x[K,N] contraction; fused += so v7x can accumulate in the
        # MRB without a pop -> VPU add -> store round trip per K step.
        acc_ref[...] += lax.dot_general(
            x, w,
            dimension_numbers=(((1,), (0,)), ((), ())),
            preferred_element_type=jnp.float32,
        )

        if norm:
            # x tiles are identical across j for a fixed i: compute the
            # running row-wise sum(x*x) only on the first N tile, reuse after.
            @pl.when(jnp.logical_and(j == 0, k == 0))
            def _init_ss():
                ss_ref[...] = jnp.zeros_like(ss_ref)

            @pl.when(j == 0)
            def _accum_ss():
                xf = x.astype(jnp.float32)
                ss_ref[...] += jnp.sum(xf * xf, axis=1, keepdims=True)

        @pl.when(k == pl.num_programs(2) - 1)
        def _finalize():
            y = acc_ref[...]
            if norm:
                y = y * lax.rsqrt(ss_ref[...])           # EUP rsqrt, no divide
            if use_bias:
                y = y + b_ref[...].astype(jnp.float32)   # [1, tn] broadcast
            o_ref[...] = y.astype(o_ref.dtype)

    return kernel


def linear_forward(x, weight_t, bias=None, *, norm=True, use_bias=True,
                   tm=None, tn=None, tk=None,
                   vmem_limit_bytes=None, w_buffer_count=None):
    """Forward pass of the PyTorch `Linear` module.

    x:        [B, IN]
    weight_t: [IN, OUT] — the nn.Linear weight stored PRE-TRANSPOSED (W^T).
              This is a one-time, init-side layout change (see init_params /
              from_pytorch_weight); there is no per-call HBM transpose.
    bias:     [OUT] or None
    returns   [B, OUT] (same dtype as x)
    """
    B, IN = x.shape
    IN2, OUT = weight_t.shape
    assert IN == IN2, f"in_channel mismatch: x has {IN}, weight_t has {IN2}"

    use_bias = bool(use_bias) and bias is not None
    out_dtype = x.dtype
    acc_in_out = jnp.dtype(out_dtype) == jnp.dtype(jnp.float32)

    budget = _vmem_budget() if vmem_limit_bytes is None else int(vmem_limit_bytes)
    sub = _sublane_multiple(x.dtype)

    # Tile selection: minimize padding, then shrink until the double-buffered
    # footprint fits the VMEM budget.
    if tm is None:
        tm = _pick_tile(B, [c for c in (512, 256, 128, 64, 32, 16, 8) if c >= sub])
    if tn is None:
        tn = _pick_tile(OUT, (512, 256, 128))
    if tk is None:
        tk = _pick_tile(IN, (2048, 1024, 512, 256, 128))
    tm = max(tm, sub)

    in_bytes = jnp.dtype(x.dtype).itemsize
    out_bytes = jnp.dtype(out_dtype).itemsize

    def footprint(tm_, tn_, tk_):
        f = 2 * (tm_ * tk_ * in_bytes + tk_ * tn_ * in_bytes + tm_ * tn_ * out_bytes)
        if use_bias:
            f += 2 * tn_ * out_bytes
        if not acc_in_out:
            f += tm_ * tn_ * 4            # f32 accumulator scratch
        if norm:
            f += tm_ * 128 * 4            # (tm, 1) f32 scratch, lane-padded
        return f

    while footprint(tm, tn, tk) > budget and tk > 128:
        tk //= 2
    while footprint(tm, tn, tk) > budget and tn > 128:
        tn //= 2
    while footprint(tm, tn, tk) > budget and tm > sub:
        tm = max(sub, tm // 2)

    Bp, OUTp, INp = _round_up(B, tm), _round_up(OUT, tn), _round_up(IN, tk)

    # Zero padding along K contributes nothing to the dot or to sum(x*x);
    # padded rows/cols are sliced off below.  (Padded rows hit rsqrt(0) -> NaN
    # in the padded buffer only — do not fuse consumers onto the padded slab.)
    xp = x if (Bp == B and INp == IN) else jnp.pad(x, ((0, Bp - B), (0, INp - IN)))
    wp = weight_t if (OUTp == OUT and INp == IN) else jnp.pad(
        weight_t, ((0, INp - IN), (0, OUTp - OUT)))

    grid = (Bp // tm, OUTp // tn, INp // tk)     # reduction axis (K) last

    in_specs = [pl.BlockSpec((tm, tk), lambda i, j, k: (i, k))]            # x
    if w_buffer_count is None:
        in_specs.append(pl.BlockSpec((tk, tn), lambda i, j, k: (k, j)))    # W^T
    else:                                       # optional deeper W prefetch (v6e)
        in_specs.append(pl.BlockSpec((tk, tn), lambda i, j, k: (k, j),
                                     pipeline_mode=pl.Buffered(w_buffer_count)))
    operands = [xp, wp]
    if use_bias:
        b2d = bias.reshape(1, OUT)
        bp = b2d if OUTp == OUT else jnp.pad(b2d, ((0, 0), (0, OUTp - OUT)))
        in_specs.append(pl.BlockSpec((1, tn), lambda i, j, k: (0, j)))     # bias
        operands.append(bp)

    scratch_shapes = []
    if not acc_in_out:
        scratch_shapes.append(pltpu.VMEM((tm, tn), jnp.float32))   # accumulator
    if norm:
        scratch_shapes.append(pltpu.VMEM((tm, 1), jnp.float32))    # sum(x*x)

    # With norm on, the j==0 sum-of-squares pass must not be skipped by core
    # sharding along N, so N is "arbitrary"; M carries the parallelism.
    n_sem = "arbitrary" if norm else "parallel"

    kernel = _make_kernel(norm, use_bias, acc_in_out)

    out = pl.pallas_call(
        kernel,
        out_shape=jax.ShapeDtypeStruct((Bp, OUTp), out_dtype),
        grid_spec=pltpu.PrefetchScalarGridSpec(
            num_scalar_prefetch=0,
            grid=grid,
            in_specs=in_specs,
            out_specs=pl.BlockSpec((tm, tn), lambda i, j, k: (i, j)),
            scratch_shapes=scratch_shapes,
        ),
        compiler_params=pltpu.CompilerParams(
            dimension_semantics=("parallel", n_sem, "arbitrary"),
            vmem_limit_bytes=int(budget),
        ),
    )(*operands)

    return out[:B, :OUT]


def from_pytorch_weight(weight_oi):
    """One-time layout change: nn.Linear weight [OUT, IN] -> kernel layout [IN, OUT]."""
    return jnp.asarray(weight_oi).T


def init_params(key, in_channel, out_channel, dtype=jnp.float32):
    """nn.Linear init: xavier_uniform_(gain=0.01) weight + default bias init.

    Returns (weight_t [IN, OUT], bias [OUT]) — weight already in kernel layout.
    """
    kw, kb = jax.random.split(key)
    gain = 0.01
    bound_w = gain * math.sqrt(6.0 / (in_channel + out_channel))
    weight_t = jax.random.uniform(kw, (in_channel, out_channel),
                                  minval=-bound_w, maxval=bound_w,
                                  dtype=jnp.float32)
    bound_b = 1.0 / math.sqrt(in_channel)
    bias = jax.random.uniform(kb, (out_channel,),
                              minval=-bound_b, maxval=bound_b,
                              dtype=jnp.float32)
    return weight_t.astype(dtype), bias.astype(dtype)


if __name__ == "__main__":
    key = jax.random.PRNGKey(0)
    k1, k2, k3, k4, k5, k6 = jax.random.split(key, 6)

    def reference(x, w_t, b=None, norm=True, use_bias=True):
        y = x @ w_t
        if norm:
            y = y / jnp.linalg.norm(x, axis=1, keepdims=True)
        if use_bias:
            y = y + b
        return y

    # Case 1: the module's toy shape (single grid point after lane padding).
    B, IN, OUT = 8, 32, 16
    x = jax.random.normal(k1, (B, IN), dtype=jnp.float32)
    w_t, b = init_params(k2, IN, OUT)
    y = jax.block_until_ready(linear_forward(x, w_t, b, norm=True, use_bias=True))
    assert y.shape == (B, OUT)
    assert jnp.allclose(y, reference(x, w_t, b), atol=1e-4, rtol=1e-3)

    # Case 2: multi-tile 3x3x3 grid — exercises K accumulation, padding,
    # the j==0 sum-of-squares reuse, and the finalize-only norm/bias epilogue.
    B2, IN2, OUT2 = 24, 320, 272
    x2 = jax.random.normal(k3, (B2, IN2), dtype=jnp.float32)
    w2_t, b2 = init_params(k4, IN2, OUT2)
    y2 = jax.block_until_ready(
        linear_forward(x2, w2_t, b2, norm=True, use_bias=True, tm=8, tn=128, tk=128))
    assert y2.shape == (B2, OUT2)
    assert jnp.allclose(y2, reference(x2, w2_t, b2), atol=1e-4, rtol=1e-3)

    # Case 3: no-norm / no-bias path (no bias DMA, no scratch at all,
    # f32 output used directly as the resident accumulator).
    y3 = jax.block_until_ready(
        linear_forward(x2, w2_t, None, norm=False, use_bias=False,
                       tm=8, tn=128, tk=128))
    assert jnp.allclose(y3, x2 @ w2_t, atol=1e-4, rtol=1e-3)

    # Case 4: bf16 inputs — exercises the f32 VMEM accumulator scratch path
    # and the bf16 (16, 128) min-tile handling.
    B4, IN4, OUT4 = 16, 256, 128
    x4 = jax.random.normal(k5, (B4, IN4), dtype=jnp.bfloat16)
    w4_t, b4 = init_params(k6, IN4, OUT4, dtype=jnp.bfloat16)
    y4 = jax.block_until_ready(linear_forward(x4, w4_t, b4, norm=True, use_bias=True))
    ref4 = reference(x4.astype(jnp.float32), w4_t.astype(jnp.float32),
                     b4.astype(jnp.float32))
    assert y4.shape == (B4, OUT4)
    assert jnp.allclose(y4.astype(jnp.float32), ref4, atol=1e-2, rtol=5e-2)

    print("KERNEL_OK")
</pallas_src>

<mosaic_0001>
module attributes {stable_mosaic.version = 11 : i64} {
  func.func @kernel(%arg0: i32, %arg1: i32, %arg2: i32, %arg3: memref<8x128xf32, #tpu.memory_space<vmem>>, %arg4: memref<128x128xf32, #tpu.memory_space<vmem>>, %arg5: memref<1x128xf32, #tpu.memory_space<vmem>>, %arg6: memref<8x128xf32, #tpu.memory_space<vmem>>, %arg7: memref<8x1xf32, #tpu.memory_space<vmem>>) attributes {dimension_semantics = [#tpu.dimension_semantics<parallel>, #tpu.dimension_semantics<arbitrary>, #tpu.dimension_semantics<arbitrary>], iteration_bounds = array<i64: 1, 1, 1>, scalar_prefetch = 0 : i64, scratch_operands = 1 : i64, tpu.core_type = #tpu.core_type<tc>, window_params = [{transform_indices = @transform_0, window_bounds = array<i64: 8, 128>}, {transform_indices = @transform_1, window_bounds = array<i64: 128, 128>}, {transform_indices = @transform_2, window_bounds = array<i64: 1, 128>}, {transform_indices = @transform_3, window_bounds = array<i64: 8, 128>}]} {
    %c0_i32 = arith.constant 0 : i32
    %0 = arith.cmpi eq, %arg2, %c0_i32 : i32
    %1 = arith.extui %0 : i1 to i32
    %c0_i32_0 = arith.constant 0 : i32
    %2 = arith.cmpi ne, %1, %c0_i32_0 : i32
    scf.if %2 {
      %cst_15 = arith.constant 0.000000e+00 : f32
      %20 = vector.broadcast %cst_15 : f32 to vector<8x128xf32>
      %c0_16 = arith.constant 0 : index
      %c0_17 = arith.constant 0 : index
      %21 = vector.load %arg6[%c0_16, %c0_17] : memref<8x128xf32, #tpu.memory_space<vmem>>, vector<8x128xf32>
      tpu.vector_store %arg6[%c0_16, %c0_17], %20 {strides = array<i32>} : memref<8x128xf32, #tpu.memory_space<vmem>>, vector<8x128xf32>,
    } else {
    }
    %c0 = arith.constant 0 : index
    %c0_1 = arith.constant 0 : index
    %3 = vector.load %arg3[%c0, %c0_1] : memref<8x128xf32, #tpu.memory_space<vmem>>, vector<8x128xf32>
    %c0_2 = arith.constant 0 : index
    %c0_3 = arith.constant 0 : index
    %4 = vector.load %arg4[%c0_2, %c0_3] : memref<128x128xf32, #tpu.memory_space<vmem>>, vector<128x128xf32>
    %c0_4 = arith.constant 0 : index
    %c0_5 = arith.constant 0 : index
    %5 = vector.load %arg6[%c0_4, %c0_5] : memref<8x128xf32, #tpu.memory_space<vmem>>, vector<8x128xf32>
    %cst = arith.constant dense<0.000000e+00> : vector<8x128xf32>
    %6 = tpu.matmul %3, %4, %cst {dimension_numbers = #tpu.dot_dimension_numbers<[1], [0], [0], [1], [0, 0, 1, 1], [], []>} : vector<8x128xf32>, vector<128x128xf32>, vector<8x128xf32> -> vector<8x128xf32>
    %7 = arith.addf %5, %6 : vector<8x128xf32>
    %c0_6 = arith.constant 0 : index
    %c0_7 = arith.constant 0 : index
    %8 = vector.load %arg6[%c0_6, %c0_7] : memref<8x128xf32, #tpu.memory_space<vmem>>, vector<8x128xf32>
    tpu.vector_store %arg6[%c0_6, %c0_7], %7 {strides = array<i32>} : memref<8x128xf32, #tpu.memory_space<vmem>>, vector<8x128xf32>,
    %c0_i32_8 = arith.constant 0 : i32
    %9 = arith.cmpi eq, %arg1, %c0_i32_8 : i32
    %c0_i32_9 = arith.constant 0 : i32
    %10 = arith.cmpi eq, %arg2, %c0_i32_9 : i32
    %11 = arith.andi %9, %10 : i1
    %12 = arith.extui %11 : i1 to i32
    %c0_i32_10 = arith.constant 0 : i32
    %13 = arith.cmpi ne, %12, %c0_i32_10 : i32
    scf.if %13 {
      %cst_15 = arith.constant 0.000000e+00 : f32
      %20 = vector.broadcast %cst_15 : f32 to vector<8x1xf32>
      %c0_16 = arith.constant 0 : index
      %c0_17 = arith.constant 0 : index
      %21 = vector.load %arg7[%c0_16, %c0_17] : memref<8x1xf32, #tpu.memory_space<vmem>>, vector<8x1xf32>
      tpu.vector_store %arg7[%c0_16, %c0_17], %20 {strides = array<i32>} : memref<8x1xf32, #tpu.memory_space<vmem>>, vector<8x1xf32>,
    } else {
    }
    %c0_i32_11 = arith.constant 0 : i32
    %14 = arith.cmpi eq, %arg1, %c0_i32_11 : i32
    %15 = arith.extui %14 : i1 to i32
    %c0_i32_12 = arith.constant 0 : i32
    %16 = arith.cmpi ne, %15, %c0_i32_12 : i32
    scf.if %16 {
      %c0_15 = arith.constant 0 : index
      %c0_16 = arith.constant 0 : index
      %20 = vector.load %arg7[%c0_15, %c0_16] : memref<8x1xf32, #tpu.memory_space<vmem>>, vector<8x1xf32>
      %21 = arith.mulf %3, %3 : vector<8x128xf32>
      %cst_17 = arith.constant dense<0.000000e+00> : vector<8xf32>
      %22 = vector.multi_reduction <add>, %21, %cst_17 [1] : vector<8x128xf32> to vector<8xf32>
      %23 = vector.shape_cast %22 : vector<8xf32> to vector<8x1xf32>
      %24 = arith.addf %20, %23 : vector<8x1xf32>
      %c0_18 = arith.constant 0 : index
      %c0_19 = arith.constant 0 : index
      %25 = vector.load %arg7[%c0_18, %c0_19] : memref<8x1xf32, #tpu.memory_space<vmem>>, vector<8x1xf32>
      tpu.vector_store %arg7[%c0_18, %c0_19], %24 {strides = array<i32>} : memref<8x1xf32, #tpu.memory_space<vmem>>, vector<8x1xf32>,
    } else {
    }
    %c0_i32_13 = arith.constant 0 : i32
    %17 = arith.cmpi eq, %arg2, %c0_i32_13 : i32
    %18 = arith.extui %17 : i1 to i32
    %c0_i32_14 = arith.constant 0 : i32
    %19 = arith.cmpi ne, %18, %c0_i32_14 : i32
    scf.if %19 {
      %c0_15 = arith.constant 0 : index
      %c0_16 = arith.constant 0 : index
      %20 = vector.load %arg6[%c0_15, %c0_16] : memref<8x128xf32, #tpu.memory_space<vmem>>, vector<8x128xf32>
      %c0_17 = arith.constant 0 : index
      %c0_18 = arith.constant 0 : index
      %21 = vector.load %arg7[%c0_17, %c0_18] : memref<8x1xf32, #tpu.memory_space<vmem>>, vector<8x1xf32>
      %22 = math.rsqrt %21 : vector<8x1xf32>
      %23 = vector.broadcast %22 : vector<8x1xf32> to vector<8x128xf32>
      %24 = arith.mulf %20, %23 : vector<8x128xf32>
      %c0_19 = arith.constant 0 : index
      %c0_20 = arith.constant 0 : index
      %25 = vector.load %arg5[%c0_19, %c0_20] : memref<1x128xf32, #tpu.memory_space<vmem>>, vector<1x128xf32>
      %26 = vector.broadcast %25 : vector<1x128xf32> to vector<8x128xf32>
      %27 = arith.addf %24, %26 : vector<8x128xf32>
      %c0_21 = arith.constant 0 : index
      %c0_22 = arith.constant 0 : index
      %28 = vector.load %arg6[%c0_21, %c0_22] : memref<8x128xf32, #tpu.memory_space<vmem>>, vector<8x128xf32>
      tpu.vector_store %arg6[%c0_21, %c0_22], %27 {strides = array<i32>} : memref<8x128xf32, #tpu.memory_space<vmem>>, vector<8x128xf32>,
    } else {
    }
    return
  }
  func.func @transform_0(%arg0: i32, %arg1: i32, %arg2: i32) -> (i32, i32) {
    %c0_i32 = arith.constant 0 : i32
    return %arg0, %arg2 : i32, i32
  }
  func.func @transform_1(%arg0: i32, %arg1: i32, %arg2: i32) -> (i32, i32) {
    %c0_i32 = arith.constant 0 : i32
    return %arg2, %arg1 : i32, i32
  }
  func.func @transform_2(%arg0: i32, %arg1: i32, %arg2: i32) -> (i32, i32) {
    %c0_i32 = arith.constant 0 : i32
    %c0_i32_0 = arith.constant 0 : i32
    return %c0_i32, %arg1 : i32, i32
  }
  func.func @transform_3(%arg0: i32, %arg1: i32, %arg2: i32) -> (i32, i32) {
    %c0_i32 = arith.constant 0 : i32
    return %arg0, %arg1 : i32, i32
  }
}

</mosaic_0001>

<llo_original>
// kernel: tpu_custom_call.1
$region0: #{tpu_custom_call.1}
  #allocation0 [shape = 'u32[]', space=smem, size = 0x4, offset = 0x4, fixed_abs, tag = 'smem constant byte address 0x4 - core index']
  #allocation1 [shape = 'u32[144,128]{1,0:T(1,128)}', space=vmem, size = 0x12000, scoped, tag = 'internal scratch']
  #allocation2 [shape = 'f32[8,1]{1,0:T(8,128)}', space=vmem, size = 0x1000, scoped, tag = 'scratch operand']
  %s0 = inlined_call_operand.hbm [shape: f32[8,128], index: 0, kind: input, shape index: {}]
  %s1 = inlined_call_operand.hbm [shape: f32[128,128], index: 1, kind: input, shape index: {}]
  %s2 = inlined_call_operand.vmem [shape: f32[1,128], index: 2, kind: input, shape index: {}]
  %s3 = inlined_call_operand.hbm [shape: f32[8,128], index: 3, kind: output, shape index: {}]
  %s4 = sld [smem:[#allocation0]]
  $region46: #{tpu_custom_call.1} parent=0
    _
  %s6 = ssub.s32 1, %s4
  %s7 = scalar_select 0, %s6, %s4
  $region1: #{tpu_custom_call.1} parent=0
    #allocation3 [shape = 'u8[4096]{0}', space=vmem, size = 0x1000, scoped, tag = 'input window, operand 0, single buffered']
    #allocation4 [shape = 's32[1]{0}', space=sflag, size = 0x4, scoped, tag = 'scoped memory for tpu_custom_call.1']
    #allocation5 [shape = 's32[1]{0}', space=sflag, size = 0x4, scoped, tag = 'scoped memory for tpu_custom_call.1']
    #allocation6 [shape = 'u8[65536]{0}', space=vmem, size = 0x10000, scoped, tag = 'input window, operand 1, single buffered']
    #allocation7 [shape = 's32[1]{0}', space=sflag, size = 0x4, scoped, tag = 'scoped memory for tpu_custom_call.1']
    #allocation8 [shape = 'u8[4096]{0}', space=vmem, size = 0x1000, scoped, tag = 'output window, operand 0, single buffered']
    %8 = vsyncpa [#allocation4], 0
    %9 = vsyncpa [#allocation7], 0
    %10 = vsyncpa [#allocation5], 0
    // Predicated region
    $region2: #{tpu_custom_call.1} parent=1 // pred_check
      _
    $region3: #{tpu_custom_call.1} parent=1 // pred_check_branch
      %12 = sbr.rel (0) target = $region5
    $region4: #{tpu_custom_call.1} parent=1 // pred_region
      %s14 = ssub.s32 128, 128
      %15 = vsyncadd [#allocation4], %s14
      %s17 = sshll.u32 [#allocation3], 4
      %s18 = int_to_ptr.vmem [resolvable:$true] %s17
      %20 = dma.hbm_to_vmem [thread:$0]  %s0, 128, %s18, [#allocation4]
    $region5: #{tpu_custom_call.1} parent=1 // pred_fallthru
      _
    // Predicated region
    $region6: #{tpu_custom_call.1} parent=1 // pred_check
      _
    $region7: #{tpu_custom_call.1} parent=1 // pred_check_branch
      %22 = sbr.rel (0) target = $region9
    $region8: #{tpu_custom_call.1} parent=1 // pred_region
      %s24 = ssub.s32 2048, 2048
      %25 = vsyncadd [#allocation7], %s24
      %s26 = sshll.u32 [#allocation6], 4
      %s27 = int_to_ptr.vmem [resolvable:$true] %s26
      %32 = dma.hbm_to_vmem [thread:$0]  %s1, 2048, %s27, [#allocation7], 128, 128, 8
    $region9: #{tpu_custom_call.1} parent=1 // pred_fallthru
      _
    // Predicated region
    $region10: #{tpu_custom_call.1} parent=1 // pred_check
      _
    $region11: #{tpu_custom_call.1} parent=1 // pred_check_branch
      %34 = sbr.rel (0) target = $region13
    $region12: #{tpu_custom_call.1} parent=1 // pred_region
      _
    $region13: #{tpu_custom_call.1} parent=1 // pred_fallthru
      _
    // Predicated region
    $region14: #{tpu_custom_call.1} parent=1 // pred_check
      _
    $region15: #{tpu_custom_call.1} parent=1 // pred_check_branch
      %36 = sbr.rel (0) target = $region17
    $region16: #{tpu_custom_call.1} parent=1 // pred_region
      %37 = dma.done [#allocation4], 128
    $region17: #{tpu_custom_call.1} parent=1 // pred_fallthru
      _
    // Predicated region
    $region18: #{tpu_custom_call.1} parent=1 // pred_check
      _
    $region19: #{tpu_custom_call.1} parent=1 // pred_check_branch
      %39 = sbr.rel (0) target = $region21
    $region20: #{tpu_custom_call.1} parent=1 // pred_region
      %40 = dma.done [#allocation7], 2048
    $region21: #{tpu_custom_call.1} parent=1 // pred_fallthru
      _
    %p41 = scmp.eq.s32.totalorder 0, 0
    // Predicated region
    $region22: #{tpu_custom_call.1} parent=1 // pred_check
      %p42 = pneg %p41
    $region23: #{tpu_custom_call.1} parent=1 // pred_check_branch
      %44 = sbr.rel (%p42) target = $region25
    $region24: #{tpu_custom_call.1} parent=1 // pred_region
      %45 = vst [vmem:[#allocation8] sm:$0xff] 0.0
    $region25: #{tpu_custom_call.1} parent=1 // pred_fallthru
      _
    %v46 = vld [vmem:[#allocation3] sm:$0xff]
    %v47 = vld [vmem:[#allocation6] sm:$0xff]
    %v48 = vld [vmem:[#allocation6 + $0x8] sm:$0xff]
    %v49 = vld [vmem:[#allocation6 + $0x10] sm:$0xff]
    %v50 = vld [vmem:[#allocation6 + $0x18] sm:$0xff]
    %v51 = vld [vmem:[#allocation6 + $0x20] sm:$0xff]
    %v52 = vld [vmem:[#allocation6 + $0x28] sm:$0xff]
    %v53 = vld [vmem:[#allocation6 + $0x30] sm:$0xff]
    %v54 = vld [vmem:[#allocation6 + $0x38] sm:$0xff]
    %v55 = vld [vmem:[#allocation6 + $0x40] sm:$0xff]
    %v56 = vld [vmem:[#allocation6 + $0x48] sm:$0xff]
    %v57 = vld [vmem:[#allocation6 + $0x50] sm:$0xff]
    %v58 = vld [vmem:[#allocation6 + $0x58] sm:$0xff]
    %v59 = vld [vmem:[#allocation6 + $0x60] sm:$0xff]
    %v60 = vld [vmem:[#allocation6 + $0x68] sm:$0xff]
    %v61 = vld [vmem:[#allocation6 + $0x70] sm:$0xff]
    %v62 = vld [vmem:[#allocation6 + $0x78] sm:$0xff]
    %v63 = vld [vmem:[#allocation8] sm:$0xff]
    %64 = vmatprep.subr.mxu0 0.0
    %65 = vmatpush1.msra.mxu0 %v47
    %66 = vmatprep.subr.mxu0 0.0
    %67 = vmatpush1.msra.mxu0 %v48
    %68 = vmatprep.subr.mxu0 0.0
    %69 = vmatpush1.msra.mxu0 %v49
    %70 = vmatprep.subr.mxu0 0.0
    %71 = vmatpush1.msra.mxu0 %v50
    %72 = vmatprep.subr.mxu0 0.0
    %73 = vmatpush1.msra.mxu0 %v51
    %74 = vmatprep.subr.mxu0 0.0
    %75 = vmatpush1.msra.mxu0 %v52
    %76 = vmatprep.subr.mxu0 0.0
    %77 = vmatpush1.msra.mxu0 %v53
    %78 = vmatprep.subr.mxu0 0.0
    %79 = vmatpush1.msra.mxu0 %v54
    %80 = vmatprep.subr.mxu0 0.0
    %81 = vmatpush1.msra.mxu0 %v55
    %82 = vmatprep.subr.mxu0 0.0
    %83 = vmatpush1.msra.mxu0 %v56
    %84 = vmatprep.subr.mxu0 0.0
    %85 = vmatpush1.msra.mxu0 %v57
    %86 = vmatprep.subr.mxu0 0.0
    %87 = vmatpush1.msra.mxu0 %v58
    %88 = vmatprep.subr.mxu0 0.0
    %89 = vmatpush1.msra.mxu0 %v59
    %90 = vmatprep.subr.mxu0 0.0
    %91 = vmatpush1.msra.mxu0 %v60
    %92 = vmatprep.subr.mxu0 0.0
    %93 = vmatpush1.msra.mxu0 %v61
    %94 = vmatprep.subr.mxu0 0.0
    %95 = vmatpush1.msra.mxu0 %v62
    %96 = vmatprep.subr.mxu0 0.0
    %97 = vmatpush1.msra.mxu0 0.0
    %98 = vmatprep.subr.mxu0 0.0
    %99 = vmatpush1.msra.mxu0 0.0
    %100 = vmatprep.subr.mxu0 0.0
    %101 = vmatpush1.msra.mxu0 0.0
    %102 = vmatprep.subr.mxu0 0.0
    %103 = vmatpush1.msra.mxu0 0.0
    %104 = vmatprep.subr.mxu0 0.0
    %105 = vmatpush1.msra.mxu0 0.0
    %106 = vmatprep.subr.mxu0 0.0
    %107 = vmatpush1.msra.mxu0 0.0
    %108 = vmatprep.subr.mxu0 0.0
    %109 = vmatpush1.msra.mxu0 0.0
    %110 = vmatprep.subr.mxu0 0.0
    %111 = vmatpush1.msra.mxu0 0.0
    %112 = vmatprep.subr.mxu0 0.0
    %113 = vmatpush1.msra.mxu0 0.0
    %114 = vmatprep.subr.mxu0 0.0
    %115 = vmatpush1.msra.mxu0 0.0
    %116 = vmatprep.subr.mxu0 0.0
    %117 = vmatpush1.msra.mxu0 0.0
    %118 = vmatprep.subr.mxu0 0.0
    %119 = vmatpush1.msra.mxu0 0.0
    %120 = vmatprep.subr.mxu0 0.0
    %121 = vmatpush1.msra.mxu0 0.0
    %122 = vmatprep.subr.mxu0 0.0
    %123 = vmatpush1.msra.mxu0 0.0
    %124 = vmatprep.subr.mxu0 0.0
    %125 = vmatpush1.msra.mxu0 0.0
    %126 = vmatprep.subr.mxu0 0.0
    %127 = vmatpush1.msra.mxu0 0.0
    %128 = vmatprep.mubr.f32.mxu0 0.0
    %129 = vmatmul.mubr.f32.gmra.mrb[0].mxu0 %v46
    %v130 = vpop.f32.mrb[0].mxu0
    %v131 = vadd.f32 0.0, %v130
    %v132 = vpop.f32.mrb[0].mxu0
    %133 = vdwg.mxu0
    %v134 = vadd.f32 %v63, %v131
    %135 = vst [vmem:[#allocation8] sm:$0xff] %v134
    %p136 = scmp.eq.s32.totalorder 0, 0
    %p137 = pnand %p136, %p41
    %p138 = pneg %p137
    // Predicated region
    $region26: #{tpu_custom_call.1} parent=1 // pred_check
      _
    $region27: #{tpu_custom_call.1} parent=1 // pred_check_branch
      %140 = sbr.rel (%p137) target = $region29
    $region28: #{tpu_custom_call.1} parent=1 // pred_region
      %vm141 = vcmask 7168
      %142 = vst.msk [vmem:[#allocation2] sm:$0xff] %vm141, 0.0
    $region29: #{tpu_custom_call.1} parent=1 // pred_fallthru
      _
    // Predicated region
    $region30: #{tpu_custom_call.1} parent=1 // pred_check
      %p143 = pneg %p136
    $region31: #{tpu_custom_call.1} parent=1 // pred_check_branch
      %145 = sbr.rel (%p143) target = $region33
    $region32: #{tpu_custom_call.1} parent=1 // pred_region
      %v146 = vld [vmem:[#allocation2] sm:$0xff]
      %v147 = vmul.f32 %v46, %v46
      %148 = vadd.xlane.f32.xlu0 %v147
      %v149 = vpop.xlane.xlu0 %148
      %v150 = vadd.f32 %v146, %v149
      %vm151 = vcmask 7168
      %152 = vst.msk [vmem:[#allocation2] sm:$0xff] %vm151, %v150
    $region33: #{tpu_custom_call.1} parent=1 // pred_fallthru
      _
    // Predicated region
    $region34: #{tpu_custom_call.1} parent=1 // pred_check
      %p153 = pneg %p41
    $region35: #{tpu_custom_call.1} parent=1 // pred_check_branch
      %155 = sbr.rel (%p153) target = $region37
    $region36: #{tpu_custom_call.1} parent=1 // pred_region
      %v156 = vld [vmem:[#allocation8] sm:$0xff]
      %v157 = vld [vmem:[#allocation2] sm:$0xff]
      %v158 = vrsqrt.pop %v157
      %160 = vset.pattern.permute.xlu0 0
      %161 = vperm.xlu0 %160, %v158
      %v162 = vpop.permute.xlu0 %161
      %v164 = vmul.f32 %v156, %v162
      %v165 = vld [vmem:[%s2] sm:$0x1]
      %v167 = vlaneseq
      %v168 = vshrl.u32 %v167, 7
      %v169 = vsub.s32 0, %v168
      %v170 = vrot.slane %v165, %v169
      %v172 = vadd.f32 %v164, %v170
      %173 = vst [vmem:[#allocation8] sm:$0xff] %v172
    $region37: #{tpu_custom_call.1} parent=1 // pred_fallthru
      _
    // Predicated region
    $region38: #{tpu_custom_call.1} parent=1 // pred_check
      _
    $region39: #{tpu_custom_call.1} parent=1 // pred_check_branch
      %175 = sbr.rel (0) target = $region41
    $region40: #{tpu_custom_call.1} parent=1 // pred_region
      %s177 = ssub.s32 128, 128
      %178 = vsyncadd [#allocation5], %s177
      %s180 = sshll.u32 [#allocation8], 4
      %s181 = int_to_ptr.vmem [resolvable:$true] %s180
      %183 = dma.vmem_to_hbm [thread:$0]  %s181, 128, %s3, [#allocation5]
    $region41: #{tpu_custom_call.1} parent=1 // pred_fallthru
      _
    // Predicated region
    $region42: #{tpu_custom_call.1} parent=1 // pred_check
      _
    $region43: #{tpu_custom_call.1} parent=1 // pred_check_branch
      %185 = sbr.rel (0) target = $region45
    $region44: #{tpu_custom_call.1} parent=1 // pred_region
      %186 = dma.done [#allocation5], 128
    $region45: #{tpu_custom_call.1} parent=1 // pred_fallthru
      _
    %187 = vsyncpa [#allocation4], 1
    %188 = vsyncpa [#allocation7], 1
    %189 = vsyncpa [#allocation5], 1

</llo_original>
